<compile_context>
chip_gen: v6e
topology: v6e:2x2x1
jax: 0.10.0
libtpu: 0.0.40
codegen_flags: <defaults>
</compile_context>

<pallas_src>
from functools import partial

import jax
import jax.numpy as jnp
from jax import lax
from jax.experimental import pallas as pl
from jax.experimental.pallas import tpu as pltpu


def _dilated_conv_kernel(patch_ref, w_ref, b_ref, o_ref, *, nb):
    """One grid step processes `nb` batch elements.

    patch_ref : (nb, 9*C, H*W)  im2col patches, K ordered (kh, kw, c_in), cols (h, w)
    w_ref     : (C, 9*C)        weight slab (C_out rows, K cols) — VMEM resident
    b_ref     : (C, 1)          bias
    o_ref     : (nb, C, H*W)    output, channels-first, lane-dense spatial axis
    """
    w = w_ref[...]
    b = b_ref[...].astype(jnp.float32)
    for i in range(nb):  # static unroll; nb is small
        # Single folded MXU contraction over K = 9*C; output lands directly as
        # (C, H*W) — spatial axis on the MXU output columns, no transpose needed.
        acc = lax.dot_general(
            w, patch_ref[i],
            dimension_numbers=(((1,), (0,)), ((), ())),
            preferred_element_type=jnp.float32)
        o_ref[i] = (acc + b).astype(o_ref.dtype)


def dilated_conv_module(x_nchw, weight_oihw, bias, *, matmul_dtype=None):
    """Forward pass of DilatedConvModule: Conv2d(C, C, k=3, padding=2, dilation=2)."""
    N, C, H, W = x_nchw.shape
    HW = H * W

    # ---- wrapper-side layout glue (XLA ops, not the hot path) ----
    # Spatial pad of 2, staying in NCHW (no NHWC round-trip).
    x_pad = jnp.pad(x_nchw, ((0, 0), (0, 0), (2, 2), (2, 2)))

    # im2col of the 9 dilation-2 taps -> lane-dense (N, 9*C, H*W) slab.
    taps = [x_pad[:, :, kh * 2:kh * 2 + H, kw * 2:kw * 2 + W]
            for kh in range(3) for kw in range(3)]              # 9 x (N, C, H, W)
    patch = jnp.stack(taps, axis=1).reshape(N, 9 * C, HW)

    # PyTorch OIHW -> (C_out, kh, kw, c_in) -> (C, 9*C) slab matching the patch K order.
    w2d = jnp.transpose(weight_oihw, (0, 2, 3, 1)).reshape(C, 9 * C)
    b2 = bias.reshape(C, 1)

    if matmul_dtype is not None:
        # bf16 MXU operands (v6e/v7x); accumulation, bias and output stay f32.
        patch = patch.astype(matmul_dtype)
        w2d = w2d.astype(matmul_dtype)

    # Batch folding: >= 2 parallel grid steps when possible (both v7x TensorCores busy),
    # while folding the rest of the batch into each step to amortize per-step overhead.
    nb = N // 2 if (N >= 2 and N % 2 == 0) else 1
    grid_n = N // nb

    out = pl.pallas_call(
        partial(_dilated_conv_kernel, nb=nb),
        out_shape=jax.ShapeDtypeStruct((N, C, HW), x_nchw.dtype),
        grid=(grid_n,),
        in_specs=[
            pl.BlockSpec((nb, 9 * C, HW), lambda i: (i, 0, 0)),
            pl.BlockSpec((C, 9 * C), lambda i: (0, 0)),   # constant map: VMEM resident
            pl.BlockSpec((C, 1), lambda i: (0, 0)),
        ],
        out_specs=pl.BlockSpec((nb, C, HW), lambda i: (i, 0, 0)),
        compiler_params=pltpu.CompilerParams(
            dimension_semantics=("parallel",)),
    )(patch, w2d, b2)

    # (N, C, H*W) is already NCHW-ordered; a pure reshape finishes the job.
    return out.reshape(N, C, H, W)


if __name__ == "__main__":
    key = jax.random.PRNGKey(0)
    k_x, k_w, k_b = jax.random.split(key, 3)

    N, C, H, W = 2, 4, 16, 16

    x = jax.random.normal(k_x, (N, C, H, W), dtype=jnp.float32)

    # Deterministic parameter init mimicking PyTorch's default Conv2d init
    # (uniform in +/- 1/sqrt(fan_in), fan_in = C*3*3).
    fan_in = C * 3 * 3
    bound = 1.0 / jnp.sqrt(fan_in)
    weight = jax.random.uniform(k_w, (C, C, 3, 3), jnp.float32, -bound, bound)
    bias = jax.random.uniform(k_b, (C,), jnp.float32, -bound, bound)

    # Reference: XLA's dilated convolution.
    ref = lax.conv_general_dilated(
        x, weight,
        window_strides=(1, 1),
        padding=((2, 2), (2, 2)),
        rhs_dilation=(2, 2),
        dimension_numbers=("NCHW", "OIHW", "NCHW"),
    ) + bias.reshape(1, C, 1, 1)

    # f32 MXU-operand path: exact parity with the f32 reference.
    out = jax.block_until_ready(dilated_conv_module(x, weight, bias))
    assert out.shape == (N, C, H, W)
    assert jnp.allclose(out, ref, atol=1e-4, rtol=1e-4)

    # bf16 MXU-operand path (v6e/v7x recommendation); f32 accumulation/epilogue,
    # so only the operand rounding loosens the tolerance.
    out_bf16 = jax.block_until_ready(
        dilated_conv_module(x, weight, bias, matmul_dtype=jnp.bfloat16))
    assert jnp.allclose(out_bf16, ref, atol=5e-2, rtol=5e-2)

    print("KERNEL_OK")
</pallas_src>

<mosaic_0001>
module attributes {stable_mosaic.version = 11 : i64} {
  func.func @_dilated_conv_kernel(%arg0: i32, %arg1: memref<1x36x256xf32, #tpu.memory_space<vmem>>, %arg2: memref<4x36xf32, #tpu.memory_space<vmem>>, %arg3: memref<4x1xf32, #tpu.memory_space<vmem>>, %arg4: memref<1x4x256xf32, #tpu.memory_space<vmem>>) attributes {dimension_semantics = [#tpu.dimension_semantics<parallel>], iteration_bounds = array<i64: 2>, scalar_prefetch = 0 : i64, scratch_operands = 0 : i64, tpu.core_type = #tpu.core_type<tc>, window_params = [{transform_indices = @transform_0, window_bounds = array<i64: 1, 36, 256>}, {pipeline_mode = #tpu.pipeline_mode<synchronous>, transform_indices = @transform_1, window_bounds = array<i64: 4, 36>}, {pipeline_mode = #tpu.pipeline_mode<synchronous>, transform_indices = @transform_2, window_bounds = array<i64: 4, 1>}, {transform_indices = @transform_3, window_bounds = array<i64: 1, 4, 256>}]} {
    %c0 = arith.constant 0 : index
    %c0_0 = arith.constant 0 : index
    %0 = vector.load %arg2[%c0, %c0_0] : memref<4x36xf32, #tpu.memory_space<vmem>>, vector<4x36xf32>
    %c0_1 = arith.constant 0 : index
    %c0_2 = arith.constant 0 : index
    %1 = vector.load %arg3[%c0_1, %c0_2] : memref<4x1xf32, #tpu.memory_space<vmem>>, vector<4x1xf32>
    %c0_3 = arith.constant 0 : index
    %c0_4 = arith.constant 0 : index
    %c0_5 = arith.constant 0 : index
    %2 = vector.load %arg1[%c0_3, %c0_4, %c0_5] : memref<1x36x256xf32, #tpu.memory_space<vmem>>, vector<1x36x256xf32>
    %3 = vector.shape_cast %2 : vector<1x36x256xf32> to vector<36x256xf32>
    %cst = arith.constant dense<0.000000e+00> : vector<4x256xf32>
    %4 = tpu.matmul %0, %3, %cst {dimension_numbers = #tpu.dot_dimension_numbers<[1], [0], [0], [1], [0, 0, 1, 1], [], []>} : vector<4x36xf32>, vector<36x256xf32>, vector<4x256xf32> -> vector<4x256xf32>
    %5 = vector.broadcast %1 : vector<4x1xf32> to vector<4x256xf32>
    %6 = arith.addf %4, %5 : vector<4x256xf32>
    %c0_6 = arith.constant 0 : index
    %c0_7 = arith.constant 0 : index
    %c0_8 = arith.constant 0 : index
    %7 = vector.load %arg4[%c0_6, %c0_7, %c0_8] : memref<1x4x256xf32, #tpu.memory_space<vmem>>, vector<1x4x256xf32>
    %8 = vector.shape_cast %7 : vector<1x4x256xf32> to vector<4x256xf32>
    %9 = vector.shape_cast %6 : vector<4x256xf32> to vector<1x4x256xf32>
    tpu.vector_store %arg4[%c0_6, %c0_7, %c0_8], %9 {strides = array<i32>} : memref<1x4x256xf32, #tpu.memory_space<vmem>>, vector<1x4x256xf32>,
    return
  }
  func.func @transform_0(%arg0: i32) -> (i32, i32, i32) {
    %c0_i32 = arith.constant 0 : i32
    %c0_i32_0 = arith.constant 0 : i32
    %c0_i32_1 = arith.constant 0 : i32
    return %arg0, %c0_i32, %c0_i32_0 : i32, i32, i32
  }
  func.func @transform_1(%arg0: i32) -> (i32, i32) {
    %c0_i32 = arith.constant 0 : i32
    %c0_i32_0 = arith.constant 0 : i32
    %c0_i32_1 = arith.constant 0 : i32
    return %c0_i32, %c0_i32_0 : i32, i32
  }
  func.func @transform_2(%arg0: i32) -> (i32, i32) {
    %c0_i32 = arith.constant 0 : i32
    %c0_i32_0 = arith.constant 0 : i32
    %c0_i32_1 = arith.constant 0 : i32
    return %c0_i32, %c0_i32_0 : i32, i32
  }
  func.func @transform_3(%arg0: i32) -> (i32, i32, i32) {
    %c0_i32 = arith.constant 0 : i32
    %c0_i32_0 = arith.constant 0 : i32
    %c0_i32_1 = arith.constant 0 : i32
    return %arg0, %c0_i32, %c0_i32_0 : i32, i32, i32
  }
}

</mosaic_0001>

<llo_original>
// kernel: tpu_custom_call.1
$region0: #{tpu_custom_call.1}
  #allocation0 [shape = 'u32[]', space=smem, size = 0x4, offset = 0x4, fixed_abs, tag = 'smem constant byte address 0x4 - core index']
  #allocation1 [shape = 'u32[144,128]{1,0:T(1,128)}', space=vmem, size = 0x12000, scoped, tag = 'internal scratch']
  %s0 = inlined_call_operand.vmem [shape: f32[2,36,256], index: 0, kind: input, shape index: {}]
  %s1 = inlined_call_operand.vmem [shape: f32[4,36], index: 1, kind: input, shape index: {}]
  %s2 = inlined_call_operand.vmem [shape: f32[4,1], index: 2, kind: input, shape index: {}]
  %s3 = inlined_call_operand.hbm [shape: f32[2,4,256], index: 3, kind: output, shape index: {}]
  %s4 = sld [smem:[#allocation0]]
  $region45: #{tpu_custom_call.1} parent=0
    _
  %s6 = ssub.s32 1, %s4
  %s7 = scalar_select 0, %s6, %s4
  $region1: #{tpu_custom_call.1} parent=0
    #allocation2 [shape = 'u8[8192]{0}', space=vmem, size = 0x2000, scoped, tag = 'output window, operand 0']
    #allocation3 [shape = 's32[2]{0}', space=sflag, size = 0x8, scoped, tag = 'scoped memory for tpu_custom_call.1']
    %8 = vsyncpa [#allocation3], 0
    %s9 = scalar_lea.sflag [#allocation3], 1
    %10 = vsyncpa %s9, 0
    loop: start=0, step=1, limit=4
    $region2: #{tpu_custom_call.1} parent=1 // loop_pre_header
      _
    $region3: #{tpu_custom_call.1} parent=1 // loop_header
      %s12 = sphi 0, %s16
      %p13 = scmp.ge.s32.totalorder %s12, 4
      %s22 = sphi 0, %s24
      %s25 = sphi 0, %s22
      %s26 = sphi 0, %s25
      %s42 = sphi 0, %s26
      %s46 = sphi 0, %s46
      %s48 = sphi 0, %s46
      %s49 = sphi 0, %s48
      %s63 = sphi 0, %s49
      %s67 = sphi 0, %s67
      %s69 = sphi 0, %s67
      %s70 = sphi 0, %s69
      %s84 = sphi 0, %s70
      %s90 = sphi 0, %s92
      %s93 = sphi 0, %s90
      %s94 = sphi 0, %s93
      %s110 = sphi 0, %s94
    $region4: #{tpu_custom_call.1} parent=1 // loop_header_branch
      %15 = sbr.rel (%p13) target = $region8
    $region5: #{tpu_custom_call.1} parent=1 // loop_body
      %s17 = ssub.s32 %s12, 1
      %s18 = ssub.s32 %s12, 2
      %s19 = sadd.s32 %s12, 1
      %s20 = ssub.s32 %s12, %s19
      %p21 = scmp.eq.s32.totalorder %s20, 0
      %s23 = sadd.s32 %s22, 1
      %s24 = scalar_select %p21, %s22, %s23
      %p27 = pneg %p21
      %p28 = scmp.eq.s32.totalorder %s12, 1
      %p29 = por %p27, %p28
      %p30 = scmp.ne.s32.totalorder %s22, %s25
      %p31 = scmp.eq.s32.totalorder %s12, 0
      %p32 = por %p30, %p31
      %p33 = scmp.ne.s32.totalorder %s22, %s25
      %p34 = scmp.eq.s32.totalorder %s17, 1
      %p35 = por %p33, %p34
      %p36 = scmp.ne.s32.totalorder %s25, %s26
      %p37 = scmp.eq.s32.totalorder %s17, 0
      %p38 = por %p36, %p37
      %p39 = scmp.ne.s32.totalorder %s25, %s26
      %p40 = scmp.eq.s32.totalorder %s18, 1
      %p41 = por %p39, %p40
      %p43 = scmp.ne.s32.totalorder %s26, %s42
      %p44 = scmp.eq.s32.totalorder %s18, 0
      %p45 = por %p43, %p44
      %s47 = sadd.s32 %s46, 1
      %p50 = scmp.eq.s32.totalorder %s12, 1
      %p51 = scmp.ne.s32.totalorder %s46, %s48
      %p52 = scmp.eq.s32.totalorder %s12, 0
      %p53 = por %p51, %p52
      %p54 = scmp.ne.s32.totalorder %s46, %s48
      %p55 = scmp.eq.s32.totalorder %s17, 1
      %p56 = por %p54, %p55
      %p57 = scmp.ne.s32.totalorder %s48, %s49
      %p58 = scmp.eq.s32.totalorder %s17, 0
      %p59 = por %p57, %p58
      %p60 = scmp.ne.s32.totalorder %s48, %s49
      %p61 = scmp.eq.s32.totalorder %s18, 1
      %p62 = por %p60, %p61
      %p64 = scmp.ne.s32.totalorder %s49, %s63
      %p65 = scmp.eq.s32.totalorder %s18, 0
      %p66 = por %p64, %p65
      %s68 = sadd.s32 %s67, 1
      %p71 = scmp.eq.s32.totalorder %s12, 1
      %p72 = scmp.ne.s32.totalorder %s67, %s69
      %p73 = scmp.eq.s32.totalorder %s12, 0
      %p74 = por %p72, %p73
      %p75 = scmp.ne.s32.totalorder %s67, %s69
      %p76 = scmp.eq.s32.totalorder %s17, 1
      %p77 = por %p75, %p76
      %p78 = scmp.ne.s32.totalorder %s69, %s70
      %p79 = scmp.eq.s32.totalorder %s17, 0
      %p80 = por %p78, %p79
      %p81 = scmp.ne.s32.totalorder %s69, %s70
      %p82 = scmp.eq.s32.totalorder %s18, 1
      %p83 = por %p81, %p82
      %p85 = scmp.ne.s32.totalorder %s70, %s84
      %p86 = scmp.eq.s32.totalorder %s18, 0
      %p87 = por %p85, %p86
      %s88 = ssub.s32 %s12, %s19
      %p89 = scmp.eq.s32.totalorder %s88, 0
      %s91 = sadd.s32 %s90, 1
      %s92 = scalar_select %p89, %s90, %s91
      %p95 = pneg %p89
      %p96 = scmp.eq.s32.totalorder %s12, 1
      %p97 = por %p95, %p96
      %p98 = scmp.ne.s32.totalorder %s90, %s93
      %p99 = scmp.eq.s32.totalorder %s12, 0
      %p100 = por %p98, %p99
      %p101 = scmp.ne.s32.totalorder %s90, %s93
      %p102 = scmp.eq.s32.totalorder %s17, 1
      %p103 = por %p101, %p102
      %p104 = scmp.ne.s32.totalorder %s93, %s94
      %p105 = scmp.eq.s32.totalorder %s17, 0
      %p106 = por %p104, %p105
      %p107 = scmp.ne.s32.totalorder %s93, %s94
      %p108 = scmp.eq.s32.totalorder %s18, 1
      %p109 = por %p107, %p108
      %p111 = scmp.ne.s32.totalorder %s94, %s110
      %p112 = scmp.eq.s32.totalorder %s18, 0
      %p113 = por %p111, %p112
      %p114 = scmp.le.s32.totalorder 1, %s12
      %p115 = scmp.lt.s32.totalorder %s12, 3
      %p116 = pnand %p114, %p115
      %p117 = pneg %p116
      // Predicated region
      $region9: #{tpu_custom_call.1} parent=5 // pred_check
        _
      $region10: #{tpu_custom_call.1} parent=5 // pred_check_branch
        %119 = sbr.rel (%p116) target = $region12
      $region11: #{tpu_custom_call.1} parent=5 // pred_region
        %s120 = ssub.s32 %s12, 1
        // Predicated region
        $region13: #{tpu_custom_call.1} parent=11 // pred_check
          %p121 = pneg %p59
        $region14: #{tpu_custom_call.1} parent=11 // pred_check_branch
          %123 = sbr.rel (%p121) target = $region16
        $region15: #{tpu_custom_call.1} parent=11 // pred_region
          _
        $region16: #{tpu_custom_call.1} parent=11 // pred_fallthru
          _
        // Predicated region
        $region17: #{tpu_custom_call.1} parent=11 // pred_check
          %p124 = pneg %p80
        $region18: #{tpu_custom_call.1} parent=11 // pred_check_branch
          %126 = sbr.rel (%p124) target = $region20
        $region19: #{tpu_custom_call.1} parent=11 // pred_region
          _
        $region20: #{tpu_custom_call.1} parent=11 // pred_fallthru
          _
      $region12: #{tpu_custom_call.1} parent=5 // pred_fallthru
        _
      %p127 = scmp.lt.s32.totalorder %s12, 2
      // Predicated region
      $region21: #{tpu_custom_call.1} parent=5 // pred_check
        %p128 = pneg %p127
      $region22: #{tpu_custom_call.1} parent=5 // pred_check_branch
        %130 = sbr.rel (%p128) target = $region24
      $region23: #{tpu_custom_call.1} parent=5 // pred_region
        // Predicated region
        $region25: #{tpu_custom_call.1} parent=23 // pred_check
          %p131 = pneg %p32
        $region26: #{tpu_custom_call.1} parent=23 // pred_check_branch
          %133 = sbr.rel (%p131) target = $region28
        $region27: #{tpu_custom_call.1} parent=23 // pred_region
          %p134 = scmp.lt.s32.totalorder %s12, 1
          %s135 = scalar_select %p134, %s12, 1
          %s136 = smul.addr %s135, 10
          %s137 = smul.addr %s136, 8
          %s138 = scalar_lea.vmem %s0, %s137
        $region28: #{tpu_custom_call.1} parent=23 // pred_fallthru
          _
      $region24: #{tpu_custom_call.1} parent=5 // pred_fallthru
        _
      %p139 = scmp.le.s32.totalorder 1, %s12
      %p140 = scmp.lt.s32.totalorder %s12, 3
      %p141 = pnand %p139, %p140
      %p142 = pneg %p141
      // Predicated region
      $region29: #{tpu_custom_call.1} parent=5 // pred_check
        _
      $region30: #{tpu_custom_call.1} parent=5 // pred_check_branch
        %144 = sbr.rel (%p141) target = $region32
      $region31: #{tpu_custom_call.1} parent=5 // pred_region
        %s145 = ssub.s32 %s12, 1
        %p146 = scmp.lt.s32.totalorder %s17, 1
        %s147 = scalar_select %p146, %s17, 1
        %s148 = smul.addr %s147, 10
        %s149 = smul.addr %s148, 8
        %s150 = scalar_lea.vmem %s0, %s149
        %p151 = pneg %p38
        %p152 = pneg %p35
        %p153 = pneg %p59
        %p154 = pneg %p56
        %p155 = pneg %p80
        %p156 = pneg %p77
        %p157 = pneg %p106
        %p158 = pneg %p103
        %s159 = sand.u32 %s93, 1
        %s160 = scalar_lea.sflag [#allocation3], %s159
        %s161 = sand.u32 %s93, 1
        %s162 = smul.addr %s161, 8
        %s163 = scalar_lea.vmem [#allocation2], %s162
        %p164 = scmp.lt.s32.totalorder %s17, 1
        %s165 = scalar_select %p164, %s17, 1
        %s166 = smul.addr %s165, 10
        %s167 = smul.addr %s166, 8
        %s168 = scalar_lea.vmem %s0, %s167
        %v169 = vld [vmem:[%s1] sm:$0xf]
        %v170 = vld [vmem:[%s2] sm:$0xf]
        %v171 = vld [vmem:[%s168] sm:$0xff]
        %v172 = vld [vmem:[%s168 + $0x8] sm:$0xff]
        %v173 = vld [vmem:[%s168 + $0x10] sm:$0xff]
        %v174 = vld [vmem:[%s168 + $0x18] sm:$0xff]
        %v175 = vld [vmem:[%s168 + $0x20] sm:$0xff]
        %v176 = vld [vmem:[%s168 + $0x28] sm:$0xff]
        %v177 = vld [vmem:[%s168 + $0x30] sm:$0xff]
        %v178 = vld [vmem:[%s168 + $0x38] sm:$0xff]
        %v179 = vld [vmem:[%s168 + $0x40] sm:$0xf]
        %v180 = vld [vmem:[%s168 + $0x48] sm:$0xf]
        %182 = vset.pattern.permute.xlu0 0
        %183 = vperm.xlu0 %182, %v170
        %v184 = vpop.permute.xlu0 %183
        %vm186 = vcmask 293888
        %v188 = vsel %vm186, %v169, 0
        %vm190 = vcmask 1043456
        %v192 = vsel %vm190, %v179, 0
        %v195 = vsel %vm190, %v180, 0
        %197 = vmatprep.subr.mxu0 0.0
        %198 = vmatpush1.msra.mxu0 0.0
        %199 = vmatprep.subr.mxu0 0.0
        %200 = vmatpush1.msra.mxu0 0.0
        %201 = vmatprep.subr.mxu0 0.0
        %202 = vmatpush1.msra.mxu0 0.0
        %203 = vmatprep.subr.mxu0 0.0
        %204 = vmatpush1.msra.mxu0 0.0
        %205 = vmatprep.subr.mxu0 0.0
        %206 = vmatpush1.msra.mxu0 0.0
        %207 = vmatprep.subr.mxu0 0.0
        %208 = vmatpush1.msra.mxu0 0.0
        %209 = vmatprep.subr.mxu0 0.0
        %210 = vmatpush1.msra.mxu0 0.0
        %211 = vmatprep.subr.mxu0 0.0
        %212 = vmatpush1.msra.mxu0 0.0
        %213 = vmatprep.subr.mxu0 0.0
        %214 = vmatpush1.msra.mxu0 0.0
        %215 = vmatprep.subr.mxu0 0.0
        %216 = vmatpush1.msra.mxu0 0.0
        %217 = vmatprep.subr.mxu0 0.0
        %218 = vmatpush1.msra.mxu0 0.0
        %219 = vmatprep.subr.mxu0 %v195
        %220 = vmatpush1.msra.mxu0 %v192
        %221 = vmatprep.subr.mxu0 %v178
        %222 = vmatpush1.msra.mxu0 %v177
        %223 = vmatprep.subr.mxu0 %v176
        %224 = vmatpush1.msra.mxu0 %v175
        %225 = vmatprep.subr.mxu0 %v174
        %226 = vmatpush1.msra.mxu0 %v173
        %227 = vmatprep.subr.mxu0 %v172
        %228 = vmatpush1.msra.mxu0 %v171
        %229 = vmatprep.subr.mxu0 0.0
        %230 = vmatpush2.msra.mxu0 0.0
        %231 = vmatprep.subr.mxu0 0.0
        %232 = vmatpush2.msra.mxu0 0.0
        %233 = vmatprep.subr.mxu0 0.0
        %234 = vmatpush2.msra.mxu0 0.0
        %235 = vmatprep.subr.mxu0 0.0
        %236 = vmatpush2.msra.mxu0 0.0
        %237 = vmatprep.subr.mxu0 0.0
        %238 = vmatpush2.msra.mxu0 0.0
        %239 = vmatprep.subr.mxu0 0.0
        %240 = vmatpush2.msra.mxu0 0.0
        %241 = vmatprep.subr.mxu0 0.0
        %242 = vmatpush2.msra.mxu0 0.0
        %243 = vmatprep.subr.mxu0 0.0
        %244 = vmatpush2.msra.mxu0 0.0
        %245 = vmatprep.subr.mxu0 0.0
        %246 = vmatpush2.msra.mxu0 0.0
        %247 = vmatprep.subr.mxu0 0.0
        %248 = vmatpush2.msra.mxu0 0.0
        %249 = vmatprep.subr.mxu0 0.0
        %250 = vmatpush2.msra.mxu0 0.0
        %251 = vmatprep.subr.mxu0 0.0
        %252 = vmatpush2.msra.mxu0 0.0
        %253 = vmatprep.subr.mxu0 0.0
        %254 = vmatpush2.msra.mxu0 0.0
        %255 = vmatprep.subr.mxu0 0.0
        %256 = vmatpush2.msra.mxu0 0.0
        %257 = vmatprep.subr.mxu0 0.0
        %258 = vmatpush2.msra.mxu0 0.0
        %259 = vmatprep.subr.mxu0 0.0
        %260 = vmatpush2.msra.mxu0 0.0
        %261 = vmatprep.mubr.f32.mxu0 0.0
        %262 = vmatmul.mubr.f32.gmra.mxu0 %v188
        %v263 = vpop.f32.mrf.mxu0
        %v264 = vadd.f32 %v184, %v263
        %v265 = vpop.f32.mrf.mxu0
        %v266 = vadd.f32 %v184, %v265
        %267 = vdwg.mxu0
        %v270 = vcombine.low %v264, %v266
        %272 = vst [vmem:[%s163] sm:$0xff] %v270
        %s273 = sand.u32 %s93, 1
        %s274 = scalar_lea.sflag [#allocation3], %s273
        %s275 = sand.u32 %s93, 1
        %s276 = smul.addr %s275, 8
        %s277 = scalar_lea.vmem [#allocation2], %s276
        // Predicated region
        $region33: #{tpu_custom_call.1} parent=31 // pred_check
          %p278 = pneg %p103
        $region34: #{tpu_custom_call.1} parent=31 // pred_check_branch
          %280 = sbr.rel (%p278) target = $region36
        $region35: #{tpu_custom_call.1} parent=31 // pred_region
          %s282 = ssub.s32 128, 128
          %283 = vsyncadd %s274, %s282
          %s284 = smul.addr %s17, 2
          %s285 = smul.addr %s284, 64
          %s286 = scalar_lea.hbm %s3, %s285
          %s288 = sshll.u32 %s277, 4
          %s289 = int_to_ptr.vmem [resolvable:$true] %s288
          %291 = dma.vmem_to_hbm [thread:$0]  %s289, 128, %s286, %s274
        $region36: #{tpu_custom_call.1} parent=31 // pred_fallthru
          _
      $region32: #{tpu_custom_call.1} parent=5 // pred_fallthru
        _
      %p292 = scmp.le.s32.totalorder 2, %s12
      // Predicated region
      $region37: #{tpu_custom_call.1} parent=5 // pred_check
        %p293 = pneg %p292
      $region38: #{tpu_custom_call.1} parent=5 // pred_check_branch
        %295 = sbr.rel (%p293) target = $region40
      $region39: #{tpu_custom_call.1} parent=5 // pred_region
        %s296 = ssub.s32 %s12, 2
        // Predicated region
        $region41: #{tpu_custom_call.1} parent=39 // pred_check
          %p297 = pneg %p109
        $region42: #{tpu_custom_call.1} parent=39 // pred_check_branch
          %299 = sbr.rel (%p297) target = $region44
        $region43: #{tpu_custom_call.1} parent=39 // pred_region
          %s300 = sand.u32 %s94, 1
          %s301 = scalar_lea.sflag [#allocation3], %s300
          %s302 = sand.u32 %s94, 1
          %s303 = smul.addr %s302, 8
          %s304 = scalar_lea.vmem [#allocation2], %s303
          %305 = dma.done %s301, 128
        $region44: #{tpu_custom_call.1} parent=39 // pred_fallthru
          _
      $region40: #{tpu_custom_call.1} parent=5 // pred_fallthru
        _
    $region6: #{tpu_custom_call.1} parent=1 // loop_footer
      %s16 = sadd.s32 1, %s12
    $region7: #{tpu_custom_call.1} parent=1 // loop_footer_branch
      %11 = sbr.rel target = $region3
    $region8: #{tpu_custom_call.1} parent=1 // loop_exit
      _
    %306 = vsyncpa [#allocation3], 1
    %s307 = scalar_lea.sflag [#allocation3], 1
    %308 = vsyncpa %s307, 1

</llo_original>
